<compile_context>
chip_gen: v5e
topology: v5e:2x2
jax: 0.10.0
libtpu: 0.0.40
codegen_flags: <defaults>
</compile_context>

<pallas_src>
import functools

import jax
import jax.numpy as jnp
import numpy as np
from jax.experimental import pallas as pl
from jax.experimental.pallas import tpu as pltpu


# ------------------------------ helpers -----------------------------------

def _round_up(n, m):
    return (n + m - 1) // m * m


def _tpu_vmem_bytes():
    try:
        return int(pltpu.get_tpu_info().vmem_capacity_bytes)
    except Exception:
        return 64 * 1024 * 1024   # conservative fallback (smallest = v7x core)


# ----------------------------- Pallas kernel -----------------------------

def _bottleneck3d_kernel(shift_w, shift_h, shift_d,
                         x_ref, masks_ref,
                         w1_ref, b1_ref,
                         w2_ref, b2_ref,
                         w3_ref, b3_ref,
                         w4_ref, b4_ref,
                         w5_ref, b5_ref,
                         o_ref):
    f32, bf16 = jnp.float32, jnp.bfloat16
    SB = x_ref.shape[-1]
    relu = lambda v: jnp.maximum(v, 0.0)

    masks = masks_ref[...]                       # [6, SB] f32, hoisted from kernel

    def pw(t_bf, w_ref, b_ref):
        # pointwise (1x1x1) conv: [Co, Ci] @ [Ci, SB] on the MXU, f32 accumulate.
        return jnp.dot(w_ref[...], t_bf, preferred_element_type=f32) + b_ref[...]

    def conv3(t, w_ref, b_ref, shift, mi):
        # k=3 / pad=1 conv along the spatial axis whose flattened-lane stride is
        # `shift`.  Taps are stacked along the CONTRACTION axis:
        #   stacked = [t[s-shift] ; t[s] ; t[s+shift]]      ([3*Pp, SB], bf16)
        #   w_ref   = [W_prev | W_mid | W_next]             ([Pp, 3*Pp])
        # -> a single MXU matmul with 3x contraction depth and no output-tap
        # sublane slicing.  Out-of-range taps are zeroed by the precomputed
        # per-lane boundary masks (also handles lane wrap-around of the rolls).
        prev = pltpu.roll(t, shift, 1) * masks[2 * mi:2 * mi + 1]        # t[s-shift]
        nxt = pltpu.roll(t, SB - shift, 1) * masks[2 * mi + 1:2 * mi + 2]  # t[s+shift]
        stacked = jnp.concatenate([prev, t, nxt], axis=0).astype(bf16)
        return jnp.dot(w_ref[...], stacked, preferred_element_type=f32) + b_ref[...]

    x = x_ref[...]                                              # [Cin, SB] bf16
    out1 = relu(pw(x, w1_ref, b1_ref))                          # [Pp, SB] f32
    out2 = conv3(out1, w2_ref, b2_ref, shift_w, 0)              # conv along W
    out3 = conv3(relu(out2), w3_ref, b3_ref, shift_h, 1) + out2 # conv along H
    res23 = out2 + out3                      # out2 dies here (fewer live volumes)
    out4 = conv3(relu(out3), w4_ref, b4_ref, shift_d, 2) + res23  # conv along D
    out5 = pw(relu(out4).astype(bf16), w5_ref, b5_ref)          # [Cout, SB]
    o_ref[...] = relu(out5 + x.astype(f32))                     # residual = x


# ------------------------------- wrapper ---------------------------------

def _pack_params(params, P, Pp):
    """bf16 MXU weights, taps packed along the contraction axis, P padded to Pp."""
    bf16, f32 = jnp.bfloat16, jnp.float32
    pad = Pp - P

    def pad_vec(b):
        return jnp.pad(b, (0, pad)).astype(f32).reshape(-1, 1)

    w1 = jnp.pad(params["w1"], ((0, pad), (0, 0))).astype(bf16)        # [Pp, Cin]
    b1 = pad_vec(params["b1"])

    def pack3(w, b):                                                   # w: [3, P, P]
        w = jnp.pad(w, ((0, 0), (0, pad), (0, pad)))                   # [3, Pp, Pp]
        w = jnp.transpose(w, (1, 0, 2)).reshape(Pp, 3 * Pp)            # taps on K
        return w.astype(bf16), pad_vec(b)

    w2, b2 = pack3(params["w2"], params["b2"])
    w3, b3 = pack3(params["w3"], params["b3"])
    w4, b4 = pack3(params["w4"], params["b4"])

    w5 = jnp.pad(params["w5"], ((0, 0), (0, pad))).astype(bf16)        # [Cout, Pp]
    b5 = params["b5"].astype(f32).reshape(-1, 1)
    return [w1, b1, w2, b2, w3, b3, w4, b4, w5, b5]


def bottleneck3d_pallas(x, params, fold_batch=None):
    """x: [N, Cin, D, H, W] (NCDHW, like PyTorch). Returns [N, Cout, D, H, W]."""
    N, Cin, D, H, W = x.shape
    S = D * H * W
    P = params["w1"].shape[0]
    Cout = params["w5"].shape[0]
    assert Cout == Cin, "residual add requires planes*expansion == inplanes"

    # Per-generation VMEM budget (~75% of physical, capped): 48 MiB on v7x,
    # ~96 MiB on v5e/v6e.  Never request the whole physical VMEM.
    vmem_bytes = _tpu_vmem_bytes()
    vmem_limit = min(int(vmem_bytes * 0.75), 100 * 1024 * 1024)

    Pp = _round_up(P, 8)           # sublane-align the bottleneck width (f32 tile)

    if fold_batch is None:
        # 1-TC parts (v5e/v6e, >64 MiB VMEM): fold batch into lanes -> wider
        # matmuls, no serial per-batch grid steps.  v7x: keep batch on a
        # "parallel" grid axis so megacore can shard it across the 2 TCs.
        folded_ws = N * S * (4 * Cin + 8 * Cout + 28 * Pp)   # rough VMEM estimate
        fold_batch = (vmem_bytes > (64 << 20)) and N > 1 and folded_ws < vmem_limit // 2

    args = _pack_params(params, P, Pp)

    if fold_batch:
        NB, SB = 1, N * S
        # the transpose fuses with the f32->bf16 cast pass; lanes = N*D*H*W
        x2 = jnp.transpose(x, (1, 0, 2, 3, 4)).reshape(1, Cin, SB).astype(jnp.bfloat16)
    else:
        NB, SB = N, S
        x2 = x.reshape(N, Cin, S).astype(jnp.bfloat16)

    # Grid-invariant boundary masks, hoisted out of the kernel (one tiny operand
    # with a constant index_map -> DMA'd once, not recomputed per grid step).
    s = jnp.arange(SB, dtype=jnp.int32) % S
    w_c, h_c, d_c = s % W, (s // W) % H, s // (W * H)
    masks = jnp.stack([w_c != 0, w_c != W - 1,
                       h_c != 0, h_c != H - 1,
                       d_c != 0, d_c != D - 1]).astype(jnp.float32)   # [6, SB]

    in_specs = [pl.BlockSpec((pl.Squeezed(), Cin, SB), lambda n: (n, 0, 0)),
                pl.BlockSpec(masks.shape, lambda n: (0, 0))]
    in_specs += [pl.BlockSpec(a.shape, lambda n: (0, 0)) for a in args]
    out_spec = pl.BlockSpec((pl.Squeezed(), Cout, SB), lambda n: (n, 0, 0))

    flops = 2 * N * S * (Cin * Pp + 3 * (Pp * 3 * Pp) + Pp * Cout)
    bytes_accessed = (2 * N * Cin * S + 4 * N * Cout * S + 4 * 6 * SB
                      + sum(int(np.prod(a.shape)) * a.dtype.itemsize for a in args))

    out2d = pl.pallas_call(
        functools.partial(_bottleneck3d_kernel, 1, W, W * H),
        out_shape=jax.ShapeDtypeStruct((NB, Cout, SB), jnp.float32),
        grid_spec=pltpu.PrefetchScalarGridSpec(
            num_scalar_prefetch=0,
            grid=(NB,),
            in_specs=in_specs,
            out_specs=out_spec,
        ),
        compiler_params=pltpu.CompilerParams(
            dimension_semantics=("parallel",),   # no cross-step carry
            vmem_limit_bytes=vmem_limit,
        ),
        cost_estimate=pl.CostEstimate(
            flops=flops, transcendentals=0, bytes_accessed=bytes_accessed),
    )(x2, masks, *args)

    if fold_batch:
        return out2d.reshape(Cout, N, D, H, W).transpose(1, 0, 2, 3, 4)
    return out2d.reshape(N, Cout, D, H, W)


# --------------------------- parameter set-up -----------------------------

def make_params(key, inplanes, planes, expansion, eps=1e-5):
    """Deterministic synthetic weights; BatchNorm folded into conv weights.

    Natural layouts (packing/padding happens in the Pallas wrapper):
      w1: [P, Cin]          (1x1x1 conv)
      w2/w3/w4: [3, P, P]   (k=3 separable convs, taps = prev/mid/next)
      w5: [Cout, P]         (1x1x1 expansion conv)
      b*: [C]
    Weights are rounded through bf16 so the f32 reference and the bf16 kernel
    share identical weight values.
    """
    cout = planes * expansion
    ks = jax.random.split(key, 10)

    def bn_fold(k, c):
        kg, kb, km, kv = jax.random.split(k, 4)
        gamma = 1.0 + 0.1 * jax.random.normal(kg, (c,), jnp.float32)
        beta = 0.1 * jax.random.normal(kb, (c,), jnp.float32)
        mean = 0.1 * jax.random.normal(km, (c,), jnp.float32)
        var = jnp.abs(jax.random.normal(kv, (c,), jnp.float32)) + 0.5
        scale = gamma / jnp.sqrt(var + eps)
        bias = beta - mean * scale
        return scale, bias

    def q(w):  # bf16-representable weights (lossless cast inside the wrapper)
        return w.astype(jnp.bfloat16).astype(jnp.float32)

    p = {}
    s, b = bn_fold(ks[0], planes)
    w = 0.1 * jax.random.normal(ks[1], (planes, inplanes), jnp.float32)
    p["w1"], p["b1"] = q(w * s[:, None]), b
    for i, (kw, kb) in enumerate([(ks[2], ks[3]), (ks[4], ks[5]), (ks[6], ks[7])]):
        s, b = bn_fold(kb, planes)
        w = 0.1 * jax.random.normal(kw, (3, planes, planes), jnp.float32)
        p[f"w{i + 2}"] = q(w * s[None, :, None])      # BN scale on output channels
        p[f"b{i + 2}"] = b
    s, b = bn_fold(ks[8], cout)
    w = 0.1 * jax.random.normal(ks[9], (cout, planes), jnp.float32)
    p["w5"], p["b5"] = q(w * s[:, None]), b
    return p


# --------------------------- plain-JAX reference --------------------------

def bottleneck3d_ref(x, p):
    """f32 reference in NCDHW, mirroring the PyTorch forward (stride=1)."""
    def pw(t, w, b):
        return jnp.einsum("oi,nidhw->nodhw", w, t) + b.reshape(1, -1, 1, 1, 1)

    def conv3(t, w3, b, axis):           # w3: [3, Co, Ci], taps = prev/mid/next
        pad = [(0, 0)] * t.ndim
        pad[axis] = (1, 1)
        tp = jnp.pad(t, pad)
        n = t.shape[axis]

        def sl(k):
            idx = [slice(None)] * t.ndim
            idx[axis] = slice(k, k + n)
            return tp[tuple(idx)]

        out = sum(jnp.einsum("oi,nidhw->nodhw", w3[k], sl(k)) for k in range(3))
        return out + b.reshape(1, -1, 1, 1, 1)

    relu = lambda v: jnp.maximum(v, 0.0)
    out1 = relu(pw(x, p["w1"], p["b1"]))
    out2 = conv3(out1, p["w2"], p["b2"], axis=4)                 # conv along W
    out3 = conv3(relu(out2), p["w3"], p["b3"], axis=3) + out2    # conv along H
    out4 = conv3(relu(out3), p["w4"], p["b4"], axis=2) + out2 + out3  # along D
    out5 = pw(relu(out4), p["w5"], p["b5"])
    return relu(out5 + x)


# --------------------------------- main ------------------------------------

if __name__ == "__main__":
    N, D, H, W = 2, 8, 8, 8
    planes, expansion = 4, 4
    inplanes = planes * expansion   # 16, so the final residual add is valid

    key = jax.random.PRNGKey(0)
    kx, kp = jax.random.split(key)
    x = 0.5 * jax.random.normal(kx, (N, inplanes, D, H, W), jnp.float32)
    params = make_params(kp, inplanes, planes, expansion)

    out = jax.block_until_ready(jax.jit(bottleneck3d_pallas)(x, params))
    ref = jax.block_until_ready(bottleneck3d_ref(x, params))

    # bf16 matmul operands (incl. the bf16 activation input) with f32
    # accumulation -> looser tolerance than a pure-f32 comparison.
    np.testing.assert_allclose(np.asarray(out), np.asarray(ref),
                               rtol=3e-2, atol=3e-2)
    # TODO(synk): stride != 1 (AvgPool3d downsample2/3/4) and an external
    # `downsample` module are not implemented (dead in the default
    # stride=1 / downsample=None forward).
    print("KERNEL_OK")
</pallas_src>

<mosaic_0001>
module attributes {stable_mosaic.version = 11 : i64} {
  func.func @_bottleneck3d_kernel(%arg0: i32, %arg1: memref<1x16x512xbf16, #tpu.memory_space<vmem>>, %arg2: memref<6x512xf32, #tpu.memory_space<vmem>>, %arg3: memref<8x16xbf16, #tpu.memory_space<vmem>>, %arg4: memref<8x1xf32, #tpu.memory_space<vmem>>, %arg5: memref<8x24xbf16, #tpu.memory_space<vmem>>, %arg6: memref<8x1xf32, #tpu.memory_space<vmem>>, %arg7: memref<8x24xbf16, #tpu.memory_space<vmem>>, %arg8: memref<8x1xf32, #tpu.memory_space<vmem>>, %arg9: memref<8x24xbf16, #tpu.memory_space<vmem>>, %arg10: memref<8x1xf32, #tpu.memory_space<vmem>>, %arg11: memref<16x8xbf16, #tpu.memory_space<vmem>>, %arg12: memref<16x1xf32, #tpu.memory_space<vmem>>, %arg13: memref<1x16x512xf32, #tpu.memory_space<vmem>>) attributes {dimension_semantics = [#tpu.dimension_semantics<parallel>], iteration_bounds = array<i64: 2>, scalar_prefetch = 0 : i64, scratch_operands = 0 : i64, tpu.core_type = #tpu.core_type<tc>, window_params = [{transform_indices = @transform_0, window_bounds = array<i64: 1, 16, 512>}, {pipeline_mode = #tpu.pipeline_mode<synchronous>, transform_indices = @transform_1, window_bounds = array<i64: 6, 512>}, {pipeline_mode = #tpu.pipeline_mode<synchronous>, transform_indices = @transform_2, window_bounds = array<i64: 8, 16>}, {pipeline_mode = #tpu.pipeline_mode<synchronous>, transform_indices = @transform_3, window_bounds = array<i64: 8, 1>}, {pipeline_mode = #tpu.pipeline_mode<synchronous>, transform_indices = @transform_4, window_bounds = array<i64: 8, 24>}, {pipeline_mode = #tpu.pipeline_mode<synchronous>, transform_indices = @transform_5, window_bounds = array<i64: 8, 1>}, {pipeline_mode = #tpu.pipeline_mode<synchronous>, transform_indices = @transform_6, window_bounds = array<i64: 8, 24>}, {pipeline_mode = #tpu.pipeline_mode<synchronous>, transform_indices = @transform_7, window_bounds = array<i64: 8, 1>}, {pipeline_mode = #tpu.pipeline_mode<synchronous>, transform_indices = @transform_8, window_bounds = array<i64: 8, 24>}, {pipeline_mode = #tpu.pipeline_mode<synchronous>, transform_indices = @transform_9, window_bounds = array<i64: 8, 1>}, {pipeline_mode = #tpu.pipeline_mode<synchronous>, transform_indices = @transform_10, window_bounds = array<i64: 16, 8>}, {pipeline_mode = #tpu.pipeline_mode<synchronous>, transform_indices = @transform_11, window_bounds = array<i64: 16, 1>}, {transform_indices = @transform_12, window_bounds = array<i64: 1, 16, 512>}]} {
    %c0 = arith.constant 0 : index
    %c0_0 = arith.constant 0 : index
    %0 = vector.load %arg2[%c0, %c0_0] : memref<6x512xf32, #tpu.memory_space<vmem>>, vector<6x512xf32>
    %c0_1 = arith.constant 0 : index
    %c0_2 = arith.constant 0 : index
    %c0_3 = arith.constant 0 : index
    %1 = vector.load %arg1[%c0_1, %c0_2, %c0_3] : memref<1x16x512xbf16, #tpu.memory_space<vmem>>, vector<1x16x512xbf16>
    %2 = vector.shape_cast %1 : vector<1x16x512xbf16> to vector<16x512xbf16>
    %c0_4 = arith.constant 0 : index
    %c0_5 = arith.constant 0 : index
    %3 = vector.load %arg3[%c0_4, %c0_5] : memref<8x16xbf16, #tpu.memory_space<vmem>>, vector<8x16xbf16>
    %cst = arith.constant dense<0.000000e+00> : vector<8x512xf32>
    %4 = tpu.matmul %3, %2, %cst {dimension_numbers = #tpu.dot_dimension_numbers<[1], [0], [0], [1], [0, 0, 1, 1], [], []>} : vector<8x16xbf16>, vector<16x512xbf16>, vector<8x512xf32> -> vector<8x512xf32>
    %c0_6 = arith.constant 0 : index
    %c0_7 = arith.constant 0 : index
    %5 = vector.load %arg4[%c0_6, %c0_7] : memref<8x1xf32, #tpu.memory_space<vmem>>, vector<8x1xf32>
    %6 = vector.broadcast %5 : vector<8x1xf32> to vector<8x512xf32>
    %7 = arith.addf %4, %6 : vector<8x512xf32>
    %cst_8 = arith.constant 0.000000e+00 : f32
    %8 = vector.broadcast %cst_8 : f32 to vector<8x512xf32>
    %9 = arith.maximumf %7, %8 : vector<8x512xf32>
    %c1_i32 = arith.constant 1 : i32
    %10 = tpu.dynamic_rotate %9 by %c1_i32 dim 1 : vector<8x512xf32>, i32 -> vector<8x512xf32>
    %11 = vector.extract_strided_slice %0 {offsets = [0, 0], sizes = [1, 512], strides = [1, 1]} : vector<6x512xf32> to vector<1x512xf32>
    %12 = vector.broadcast %11 : vector<1x512xf32> to vector<8x512xf32>
    %13 = arith.mulf %10, %12 : vector<8x512xf32>
    %c511_i32 = arith.constant 511 : i32
    %14 = tpu.dynamic_rotate %9 by %c511_i32 dim 1 : vector<8x512xf32>, i32 -> vector<8x512xf32>
    %15 = vector.extract_strided_slice %0 {offsets = [1, 0], sizes = [1, 512], strides = [1, 1]} : vector<6x512xf32> to vector<1x512xf32>
    %16 = vector.broadcast %15 : vector<1x512xf32> to vector<8x512xf32>
    %17 = arith.mulf %14, %16 : vector<8x512xf32>
    %18 = tpu.concatenate %13, %9, %17 in 0 : vector<8x512xf32>, vector<8x512xf32>, vector<8x512xf32> -> vector<24x512xf32>
    %19 = arith.truncf %18 : vector<24x512xf32> to vector<24x512xbf16>
    %c0_9 = arith.constant 0 : index
    %c0_10 = arith.constant 0 : index
    %20 = vector.load %arg5[%c0_9, %c0_10] : memref<8x24xbf16, #tpu.memory_space<vmem>>, vector<8x24xbf16>
    %cst_11 = arith.constant dense<0.000000e+00> : vector<8x512xf32>
    %21 = tpu.matmul %20, %19, %cst_11 {dimension_numbers = #tpu.dot_dimension_numbers<[1], [0], [0], [1], [0, 0, 1, 1], [], []>} : vector<8x24xbf16>, vector<24x512xbf16>, vector<8x512xf32> -> vector<8x512xf32>
    %c0_12 = arith.constant 0 : index
    %c0_13 = arith.constant 0 : index
    %22 = vector.load %arg6[%c0_12, %c0_13] : memref<8x1xf32, #tpu.memory_space<vmem>>, vector<8x1xf32>
    %23 = vector.broadcast %22 : vector<8x1xf32> to vector<8x512xf32>
    %24 = arith.addf %21, %23 : vector<8x512xf32>
    %cst_14 = arith.constant 0.000000e+00 : f32
    %25 = vector.broadcast %cst_14 : f32 to vector<8x512xf32>
    %26 = arith.maximumf %24, %25 : vector<8x512xf32>
    %c8_i32 = arith.constant 8 : i32
    %27 = tpu.dynamic_rotate %26 by %c8_i32 dim 1 : vector<8x512xf32>, i32 -> vector<8x512xf32>
    %28 = vector.extract_strided_slice %0 {offsets = [2, 0], sizes = [1, 512], strides = [1, 1]} : vector<6x512xf32> to vector<1x512xf32>
    %29 = vector.broadcast %28 : vector<1x512xf32> to vector<8x512xf32>
    %30 = arith.mulf %27, %29 : vector<8x512xf32>
    %c504_i32 = arith.constant 504 : i32
    %31 = tpu.dynamic_rotate %26 by %c504_i32 dim 1 : vector<8x512xf32>, i32 -> vector<8x512xf32>
    %32 = vector.extract_strided_slice %0 {offsets = [3, 0], sizes = [1, 512], strides = [1, 1]} : vector<6x512xf32> to vector<1x512xf32>
    %33 = vector.broadcast %32 : vector<1x512xf32> to vector<8x512xf32>
    %34 = arith.mulf %31, %33 : vector<8x512xf32>
    %35 = tpu.concatenate %30, %26, %34 in 0 : vector<8x512xf32>, vector<8x512xf32>, vector<8x512xf32> -> vector<24x512xf32>
    %36 = arith.truncf %35 : vector<24x512xf32> to vector<24x512xbf16>
    %c0_15 = arith.constant 0 : index
    %c0_16 = arith.constant 0 : index
    %37 = vector.load %arg7[%c0_15, %c0_16] : memref<8x24xbf16, #tpu.memory_space<vmem>>, vector<8x24xbf16>
    %cst_17 = arith.constant dense<0.000000e+00> : vector<8x512xf32>
    %38 = tpu.matmul %37, %36, %cst_17 {dimension_numbers = #tpu.dot_dimension_numbers<[1], [0], [0], [1], [0, 0, 1, 1], [], []>} : vector<8x24xbf16>, vector<24x512xbf16>, vector<8x512xf32> -> vector<8x512xf32>
    %c0_18 = arith.constant 0 : index
    %c0_19 = arith.constant 0 : index
    %39 = vector.load %arg8[%c0_18, %c0_19] : memref<8x1xf32, #tpu.memory_space<vmem>>, vector<8x1xf32>
    %40 = vector.broadcast %39 : vector<8x1xf32> to vector<8x512xf32>
    %41 = arith.addf %38, %40 : vector<8x512xf32>
    %42 = arith.addf %41, %24 : vector<8x512xf32>
    %43 = arith.addf %24, %42 : vector<8x512xf32>
    %cst_20 = arith.constant 0.000000e+00 : f32
    %44 = vector.broadcast %cst_20 : f32 to vector<8x512xf32>
    %45 = arith.maximumf %42, %44 : vector<8x512xf32>
    %c64_i32 = arith.constant 64 : i32
    %46 = tpu.dynamic_rotate %45 by %c64_i32 dim 1 : vector<8x512xf32>, i32 -> vector<8x512xf32>
    %47 = vector.extract_strided_slice %0 {offsets = [4, 0], sizes = [1, 512], strides = [1, 1]} : vector<6x512xf32> to vector<1x512xf32>
    %48 = vector.broadcast %47 : vector<1x512xf32> to vector<8x512xf32>
    %49 = arith.mulf %46, %48 : vector<8x512xf32>
    %c448_i32 = arith.constant 448 : i32
    %50 = tpu.dynamic_rotate %45 by %c448_i32 dim 1 : vector<8x512xf32>, i32 -> vector<8x512xf32>
    %51 = vector.extract_strided_slice %0 {offsets = [5, 0], sizes = [1, 512], strides = [1, 1]} : vector<6x512xf32> to vector<1x512xf32>
    %52 = vector.broadcast %51 : vector<1x512xf32> to vector<8x512xf32>
    %53 = arith.mulf %50, %52 : vector<8x512xf32>
    %54 = tpu.concatenate %49, %45, %53 in 0 : vector<8x512xf32>, vector<8x512xf32>, vector<8x512xf32> -> vector<24x512xf32>
    %55 = arith.truncf %54 : vector<24x512xf32> to vector<24x512xbf16>
    %c0_21 = arith.constant 0 : index
    %c0_22 = arith.constant 0 : index
    %56 = vector.load %arg9[%c0_21, %c0_22] : memref<8x24xbf16, #tpu.memory_space<vmem>>, vector<8x24xbf16>
    %cst_23 = arith.constant dense<0.000000e+00> : vector<8x512xf32>
    %57 = tpu.matmul %56, %55, %cst_23 {dimension_numbers = #tpu.dot_dimension_numbers<[1], [0], [0], [1], [0, 0, 1, 1], [], []>} : vector<8x24xbf16>, vector<24x512xbf16>, vector<8x512xf32> -> vector<8x512xf32>
    %c0_24 = arith.constant 0 : index
    %c0_25 = arith.constant 0 : index
    %58 = vector.load %arg10[%c0_24, %c0_25] : memref<8x1xf32, #tpu.memory_space<vmem>>, vector<8x1xf32>
    %59 = vector.broadcast %58 : vector<8x1xf32> to vector<8x512xf32>
    %60 = arith.addf %57, %59 : vector<8x512xf32>
    %61 = arith.addf %60, %43 : vector<8x512xf32>
    %cst_26 = arith.constant 0.000000e+00 : f32
    %62 = vector.broadcast %cst_26 : f32 to vector<8x512xf32>
    %63 = arith.maximumf %61, %62 : vector<8x512xf32>
    %64 = arith.truncf %63 : vector<8x512xf32> to vector<8x512xbf16>
    %c0_27 = arith.constant 0 : index
    %c0_28 = arith.constant 0 : index
    %65 = vector.load %arg11[%c0_27, %c0_28] : memref<16x8xbf16, #tpu.memory_space<vmem>>, vector<16x8xbf16>
    %cst_29 = arith.constant dense<0.000000e+00> : vector<16x512xf32>
    %66 = tpu.matmul %65, %64, %cst_29 {dimension_numbers = #tpu.dot_dimension_numbers<[1], [0], [0], [1], [0, 0, 1, 1], [], []>} : vector<16x8xbf16>, vector<8x512xbf16>, vector<16x512xf32> -> vector<16x512xf32>
    %c0_30 = arith.constant 0 : index
    %c0_31 = arith.constant 0 : index
    %67 = vector.load %arg12[%c0_30, %c0_31] : memref<16x1xf32, #tpu.memory_space<vmem>>, vector<16x1xf32>
    %68 = vector.broadcast %67 : vector<16x1xf32> to vector<16x512xf32>
    %69 = arith.addf %66, %68 : vector<16x512xf32>
    %70 = arith.extf %2 : vector<16x512xbf16> to vector<16x512xf32>
    %71 = arith.addf %69, %70 : vector<16x512xf32>
    %cst_32 = arith.constant 0.000000e+00 : f32
    %72 = vector.broadcast %cst_32 : f32 to vector<16x512xf32>
    %73 = arith.maximumf %71, %72 : vector<16x512xf32>
    %c0_33 = arith.constant 0 : index
    %c0_34 = arith.constant 0 : index
    %c0_35 = arith.constant 0 : index
    %74 = vector.load %arg13[%c0_33, %c0_34, %c0_35] : memref<1x16x512xf32, #tpu.memory_space<vmem>>, vector<1x16x512xf32>
    %75 = vector.shape_cast %74 : vector<1x16x512xf32> to vector<16x512xf32>
    %76 = vector.shape_cast %73 : vector<16x512xf32> to vector<1x16x512xf32>
    tpu.vector_store %arg13[%c0_33, %c0_34, %c0_35], %76 {strides = array<i32>} : memref<1x16x512xf32, #tpu.memory_space<vmem>>, vector<1x16x512xf32>,
    return
  }
  func.func @transform_0(%arg0: i32) -> (i32, i32, i32) {
    %c0_i32 = arith.constant 0 : i32
    %c0_i32_0 = arith.constant 0 : i32
    %c0_i32_1 = arith.constant 0 : i32
    return %arg0, %c0_i32, %c0_i32_0 : i32, i32, i32
  }
  func.func @transform_1(%arg0: i32) -> (i32, i32) {
    %c0_i32 = arith.constant 0 : i32
    %c0_i32_0 = arith.constant 0 : i32
    %c0_i32_1 = arith.constant 0 : i32
    return %c0_i32, %c0_i32_0 : i32, i32
  }
  func.func @transform_2(%arg0: i32) -> (i32, i32) {
    %c0_i32 = arith.constant 0 : i32
    %c0_i32_0 = arith.constant 0 : i32
    %c0_i32_1 = arith.constant 0 : i32
    return %c0_i32, %c0_i32_0 : i32, i32
  }
  func.func @transform_3(%arg0: i32) -> (i32, i32) {
    %c0_i32 = arith.constant 0 : i32
    %c0_i32_0 = arith.constant 0 : i32
    %c0_i32_1 = arith.constant 0 : i32
    return %c0_i32, %c0_i32_0 : i32, i32
  }
  func.func @transform_4(%arg0: i32) -> (i32, i32) {
    %c0_i32 = arith.constant 0 : i32
    %c0_i32_0 = arith.constant 0 : i32
    %c0_i32_1 = arith.constant 0 : i32
    return %c0_i32, %c0_i32_0 : i32, i32
  }
  func.func @transform_5(%arg0: i32) -> (i32, i32) {
    %c0_i32 = arith.constant 0 : i32
    %c0_i32_0 = arith.constant 0 : i32
    %c0_i32_1 = arith.constant 0 : i32
    return %c0_i32, %c0_i32_0 : i32, i32
  }
  func.func @transform_6(%arg0: i32) -> (i32, i32) {
    %c0_i32 = arith.constant 0 : i32
    %c0_i32_0 = arith.constant 0 : i32
    %c0_i32_1 = arith.constant 0 : i32
    return %c0_i32, %c0_i32_0 : i32, i32
  }
  func.func @transform_7(%arg0: i32) -> (i32, i32) {
    %c0_i32 = arith.constant 0 : i32
    %c0_i32_0 = arith.constant 0 : i32
    %c0_i32_1 = arith.constant 0 : i32
    return %c0_i32, %c0_i32_0 : i32, i32
  }
  func.func @transform_8(%arg0: i32) -> (i32, i32) {
    %c0_i32 = arith.constant 0 : i32
    %c0_i32_0 = arith.constant 0 : i32
    %c0_i32_1 = arith.constant 0 : i32
    return %c0_i32, %c0_i32_0 : i32, i32
  }
  func.func @transform_9(%arg0: i32) -> (i32, i32) {
    %c0_i32 = arith.constant 0 : i32
    %c0_i32_0 = arith.constant 0 : i32
    %c0_i32_1 = arith.constant 0 : i32
    return %c0_i32, %c0_i32_0 : i32, i32
  }
  func.func @transform_10(%arg0: i32) -> (i32, i32) {
    %c0_i32 = arith.constant 0 : i32
    %c0_i32_0 = arith.constant 0 : i32
    %c0_i32_1 = arith.constant 0 : i32
    return %c0_i32, %c0_i32_0 : i32, i32
  }
  func.func @transform_11(%arg0: i32) -> (i32, i32) {
    %c0_i32 = arith.constant 0 : i32
    %c0_i32_0 = arith.constant 0 : i32
    %c0_i32_1 = arith.constant 0 : i32
    return %c0_i32, %c0_i32_0 : i32, i32
  }
  func.func @transform_12(%arg0: i32) -> (i32, i32, i32) {
    %c0_i32 = arith.constant 0 : i32
    %c0_i32_0 = arith.constant 0 : i32
    %c0_i32_1 = arith.constant 0 : i32
    return %arg0, %c0_i32, %c0_i32_0 : i32, i32, i32
  }
}

</mosaic_0001>

<llo_original>
// kernel: bottleneck3d_pallas.1
$region0: #{bottleneck3d_pallas.1}
  #allocation0 [shape = 'u32[]', space=smem, size = 0x4, offset = 0x4, fixed_abs, tag = 'smem constant byte address 0x4 - core index']
  #allocation1 [shape = 'u32[72,128]{1,0:T(1,128)}', space=vmem, size = 0x9000, scoped, tag = 'internal scratch']
  %s0 = inlined_call_operand.vmem [shape: bf16[2,16,512], index: 0, kind: input, shape index: {}]
  %s1 = inlined_call_operand.vmem [shape: f32[6,512], index: 1, kind: input, shape index: {}]
  %s2 = inlined_call_operand.vmem [shape: bf16[8,16], index: 2, kind: input, shape index: {}]
  %s3 = inlined_call_operand.vmem [shape: f32[8,1], index: 3, kind: input, shape index: {}]
  %s4 = inlined_call_operand.vmem [shape: bf16[8,24], index: 4, kind: input, shape index: {}]
  %s5 = inlined_call_operand.vmem [shape: f32[8,1], index: 5, kind: input, shape index: {}]
  %s6 = inlined_call_operand.vmem [shape: bf16[8,24], index: 6, kind: input, shape index: {}]
  %s7 = inlined_call_operand.vmem [shape: f32[8,1], index: 7, kind: input, shape index: {}]
  %s8 = inlined_call_operand.vmem [shape: bf16[8,24], index: 8, kind: input, shape index: {}]
  %s9 = inlined_call_operand.vmem [shape: f32[8,1], index: 9, kind: input, shape index: {}]
  %s10 = inlined_call_operand.vmem [shape: bf16[16,8], index: 10, kind: input, shape index: {}]
  %s11 = inlined_call_operand.vmem [shape: f32[16,1], index: 11, kind: input, shape index: {}]
  %s12 = inlined_call_operand.vmem [shape: f32[2,16,512], index: 12, kind: output, shape index: {}]
  %s13 = sld [smem:[#allocation0]]
  $region81: #{bottleneck3d_pallas.1} parent=0
    _
  %s15 = ssub.s32 1, %s13
  %s16 = scalar_select 0, %s15, %s13
  loop: start=0, step=1, limit=4
  $region2: #{bottleneck3d_pallas.1} parent=0 // loop_pre_header
    _
  $region3: #{bottleneck3d_pallas.1} parent=0 // loop_header
    %s18 = sphi 0, %s22
    %p19 = scmp.ge.s32.totalorder %s18, 4
    %s28 = sphi 0, %s30
    %s31 = sphi 0, %s28
    %s32 = sphi 0, %s31
    %s48 = sphi 0, %s32
    %s52 = sphi 0, %s52
    %s54 = sphi 0, %s52
    %s55 = sphi 0, %s54
    %s69 = sphi 0, %s55
    %s73 = sphi 0, %s73
    %s75 = sphi 0, %s73
    %s76 = sphi 0, %s75
    %s90 = sphi 0, %s76
    %s94 = sphi 0, %s94
    %s96 = sphi 0, %s94
    %s97 = sphi 0, %s96
    %s111 = sphi 0, %s97
    %s115 = sphi 0, %s115
    %s117 = sphi 0, %s115
    %s118 = sphi 0, %s117
    %s132 = sphi 0, %s118
    %s136 = sphi 0, %s136
    %s138 = sphi 0, %s136
    %s139 = sphi 0, %s138
    %s153 = sphi 0, %s139
    %s157 = sphi 0, %s157
    %s159 = sphi 0, %s157
    %s160 = sphi 0, %s159
    %s174 = sphi 0, %s160
    %s178 = sphi 0, %s178
    %s180 = sphi 0, %s178
    %s181 = sphi 0, %s180
    %s195 = sphi 0, %s181
    %s199 = sphi 0, %s199
    %s201 = sphi 0, %s199
    %s202 = sphi 0, %s201
    %s216 = sphi 0, %s202
    %s220 = sphi 0, %s220
    %s222 = sphi 0, %s220
    %s223 = sphi 0, %s222
    %s237 = sphi 0, %s223
    %s241 = sphi 0, %s241
    %s243 = sphi 0, %s241
    %s244 = sphi 0, %s243
    %s258 = sphi 0, %s244
    %s262 = sphi 0, %s262
    %s264 = sphi 0, %s262
    %s265 = sphi 0, %s264
    %s279 = sphi 0, %s265
    %s285 = sphi 0, %s287
    %s288 = sphi 0, %s285
    %s289 = sphi 0, %s288
    %s305 = sphi 0, %s289
  $region4: #{bottleneck3d_pallas.1} parent=0 // loop_header_branch
    %21 = sbr.rel (%p19) target = $region8
  $region5: #{bottleneck3d_pallas.1} parent=0 // loop_body
    %s23 = ssub.s32 %s18, 1
    %s24 = ssub.s32 %s18, 2
    %s25 = sadd.s32 %s18, 1
    %s26 = ssub.s32 %s18, %s25
    %p27 = scmp.eq.s32.totalorder %s26, 0
    %s29 = sadd.s32 %s28, 1
    %s30 = scalar_select %p27, %s28, %s29
    %p33 = pneg %p27
    %p34 = scmp.eq.s32.totalorder %s18, 1
    %p35 = por %p33, %p34
    %p36 = scmp.ne.s32.totalorder %s28, %s31
    %p37 = scmp.eq.s32.totalorder %s18, 0
    %p38 = por %p36, %p37
    %p39 = scmp.ne.s32.totalorder %s28, %s31
    %p40 = scmp.eq.s32.totalorder %s23, 1
    %p41 = por %p39, %p40
    %p42 = scmp.ne.s32.totalorder %s31, %s32
    %p43 = scmp.eq.s32.totalorder %s23, 0
    %p44 = por %p42, %p43
    %p45 = scmp.ne.s32.totalorder %s31, %s32
    %p46 = scmp.eq.s32.totalorder %s24, 1
    %p47 = por %p45, %p46
    %p49 = scmp.ne.s32.totalorder %s32, %s48
    %p50 = scmp.eq.s32.totalorder %s24, 0
    %p51 = por %p49, %p50
    %s53 = sadd.s32 %s52, 1
    %p56 = scmp.eq.s32.totalorder %s18, 1
    %p57 = scmp.ne.s32.totalorder %s52, %s54
    %p58 = scmp.eq.s32.totalorder %s18, 0
    %p59 = por %p57, %p58
    %p60 = scmp.ne.s32.totalorder %s52, %s54
    %p61 = scmp.eq.s32.totalorder %s23, 1
    %p62 = por %p60, %p61
    %p63 = scmp.ne.s32.totalorder %s54, %s55
    %p64 = scmp.eq.s32.totalorder %s23, 0
    %p65 = por %p63, %p64
    %p66 = scmp.ne.s32.totalorder %s54, %s55
    %p67 = scmp.eq.s32.totalorder %s24, 1
    %p68 = por %p66, %p67
    %p70 = scmp.ne.s32.totalorder %s55, %s69
    %p71 = scmp.eq.s32.totalorder %s24, 0
    %p72 = por %p70, %p71
    %s74 = sadd.s32 %s73, 1
    %p77 = scmp.eq.s32.totalorder %s18, 1
    %p78 = scmp.ne.s32.totalorder %s73, %s75
    %p79 = scmp.eq.s32.totalorder %s18, 0
    %p80 = por %p78, %p79
    %p81 = scmp.ne.s32.totalorder %s73, %s75
    %p82 = scmp.eq.s32.totalorder %s23, 1
    %p83 = por %p81, %p82
    %p84 = scmp.ne.s32.totalorder %s75, %s76
    %p85 = scmp.eq.s32.totalorder %s23, 0
    %p86 = por %p84, %p85
    %p87 = scmp.ne.s32.totalorder %s75, %s76
    %p88 = scmp.eq.s32.totalorder %s24, 1
    %p89 = por %p87, %p88
    %p91 = scmp.ne.s32.totalorder %s76, %s90
    %p92 = scmp.eq.s32.totalorder %s24, 0
    %p93 = por %p91, %p92
    %s95 = sadd.s32 %s94, 1
    %p98 = scmp.eq.s32.totalorder %s18, 1
    %p99 = scmp.ne.s32.totalorder %s94, %s96
    %p100 = scmp.eq.s32.totalorder %s18, 0
    %p101 = por %p99, %p100
    %p102 = scmp.ne.s32.totalorder %s94, %s96
    %p103 = scmp.eq.s32.totalorder %s23, 1
    %p104 = por %p102, %p103
    %p105 = scmp.ne.s32.totalorder %s96, %s97
    %p106 = scmp.eq.s32.totalorder %s23, 0
    %p107 = por %p105, %p106
    %p108 = scmp.ne.s32.totalorder %s96, %s97
    %p109 = scmp.eq.s32.totalorder %s24, 1
    %p110 = por %p108, %p109
    %p112 = scmp.ne.s32.totalorder %s97, %s111
    %p113 = scmp.eq.s32.totalorder %s24, 0
    %p114 = por %p112, %p113
    %s116 = sadd.s32 %s115, 1
    %p119 = scmp.eq.s32.totalorder %s18, 1
    %p120 = scmp.ne.s32.totalorder %s115, %s117
    %p121 = scmp.eq.s32.totalorder %s18, 0
    %p122 = por %p120, %p121
    %p123 = scmp.ne.s32.totalorder %s115, %s117
    %p124 = scmp.eq.s32.totalorder %s23, 1
    %p125 = por %p123, %p124
    %p126 = scmp.ne.s32.totalorder %s117, %s118
    %p127 = scmp.eq.s32.totalorder %s23, 0
    %p128 = por %p126, %p127
    %p129 = scmp.ne.s32.totalorder %s117, %s118
    %p130 = scmp.eq.s32.totalorder %s24, 1
    %p131 = por %p129, %p130
    %p133 = scmp.ne.s32.totalorder %s118, %s132
    %p134 = scmp.eq.s32.totalorder %s24, 0
    %p135 = por %p133, %p134
    %s137 = sadd.s32 %s136, 1
    %p140 = scmp.eq.s32.totalorder %s18, 1
    %p141 = scmp.ne.s32.totalorder %s136, %s138
    %p142 = scmp.eq.s32.totalorder %s18, 0
    %p143 = por %p141, %p142
    %p144 = scmp.ne.s32.totalorder %s136, %s138
    %p145 = scmp.eq.s32.totalorder %s23, 1
    %p146 = por %p144, %p145
    %p147 = scmp.ne.s32.totalorder %s138, %s139
    %p148 = scmp.eq.s32.totalorder %s23, 0
    %p149 = por %p147, %p148
    %p150 = scmp.ne.s32.totalorder %s138, %s139
    %p151 = scmp.eq.s32.totalorder %s24, 1
    %p152 = por %p150, %p151
    %p154 = scmp.ne.s32.totalorder %s139, %s153
    %p155 = scmp.eq.s32.totalorder %s24, 0
    %p156 = por %p154, %p155
    %s158 = sadd.s32 %s157, 1
    %p161 = scmp.eq.s32.totalorder %s18, 1
    %p162 = scmp.ne.s32.totalorder %s157, %s159
    %p163 = scmp.eq.s32.totalorder %s18, 0
    %p164 = por %p162, %p163
    %p165 = scmp.ne.s32.totalorder %s157, %s159
    %p166 = scmp.eq.s32.totalorder %s23, 1
    %p167 = por %p165, %p166
    %p168 = scmp.ne.s32.totalorder %s159, %s160
    %p169 = scmp.eq.s32.totalorder %s23, 0
    %p170 = por %p168, %p169
    %p171 = scmp.ne.s32.totalorder %s159, %s160
    %p172 = scmp.eq.s32.totalorder %s24, 1
    %p173 = por %p171, %p172
    %p175 = scmp.ne.s32.totalorder %s160, %s174
    %p176 = scmp.eq.s32.totalorder %s24, 0
    %p177 = por %p175, %p176
    %s179 = sadd.s32 %s178, 1
    %p182 = scmp.eq.s32.totalorder %s18, 1
    %p183 = scmp.ne.s32.totalorder %s178, %s180
    %p184 = scmp.eq.s32.totalorder %s18, 0
    %p185 = por %p183, %p184
    %p186 = scmp.ne.s32.totalorder %s178, %s180
    %p187 = scmp.eq.s32.totalorder %s23, 1
    %p188 = por %p186, %p187
    %p189 = scmp.ne.s32.totalorder %s180, %s181
    %p190 = scmp.eq.s32.totalorder %s23, 0
    %p191 = por %p189, %p190
    %p192 = scmp.ne.s32.totalorder %s180, %s181
    %p193 = scmp.eq.s32.totalorder %s24, 1
    %p194 = por %p192, %p193
    %p196 = scmp.ne.s32.totalorder %s181, %s195
    %p197 = scmp.eq.s32.totalorder %s24, 0
    %p198 = por %p196, %p197
    %s200 = sadd.s32 %s199, 1
    %p203 = scmp.eq.s32.totalorder %s18, 1
    %p204 = scmp.ne.s32.totalorder %s199, %s201
    %p205 = scmp.eq.s32.totalorder %s18, 0
    %p206 = por %p204, %p205
    %p207 = scmp.ne.s32.totalorder %s199, %s201
    %p208 = scmp.eq.s32.totalorder %s23, 1
    %p209 = por %p207, %p208
    %p210 = scmp.ne.s32.totalorder %s201, %s202
    %p211 = scmp.eq.s32.totalorder %s23, 0
    %p212 = por %p210, %p211
    %p213 = scmp.ne.s32.totalorder %s201, %s202
    %p214 = scmp.eq.s32.totalorder %s24, 1
    %p215 = por %p213, %p214
    %p217 = scmp.ne.s32.totalorder %s202, %s216
    %p218 = scmp.eq.s32.totalorder %s24, 0
    %p219 = por %p217, %p218
    %s221 = sadd.s32 %s220, 1
    %p224 = scmp.eq.s32.totalorder %s18, 1
    %p225 = scmp.ne.s32.totalorder %s220, %s222
    %p226 = scmp.eq.s32.totalorder %s18, 0
    %p227 = por %p225, %p226
    %p228 = scmp.ne.s32.totalorder %s220, %s222
    %p229 = scmp.eq.s32.totalorder %s23, 1
    %p230 = por %p228, %p229
    %p231 = scmp.ne.s32.totalorder %s222, %s223
    %p232 = scmp.eq.s32.totalorder %s23, 0
    %p233 = por %p231, %p232
    %p234 = scmp.ne.s32.totalorder %s222, %s223
    %p235 = scmp.eq.s32.totalorder %s24, 1
    %p236 = por %p234, %p235
    %p238 = scmp.ne.s32.totalorder %s223, %s237
    %p239 = scmp.eq.s32.totalorder %s24, 0
    %p240 = por %p238, %p239
    %s242 = sadd.s32 %s241, 1
    %p245 = scmp.eq.s32.totalorder %s18, 1
    %p246 = scmp.ne.s32.totalorder %s241, %s243
    %p247 = scmp.eq.s32.totalorder %s18, 0
    %p248 = por %p246, %p247
    %p249 = scmp.ne.s32.totalorder %s241, %s243
    %p250 = scmp.eq.s32.totalorder %s23, 1
    %p251 = por %p249, %p250
    %p252 = scmp.ne.s32.totalorder %s243, %s244
    %p253 = scmp.eq.s32.totalorder %s23, 0
    %p254 = por %p252, %p253
    %p255 = scmp.ne.s32.totalorder %s243, %s244
    %p256 = scmp.eq.s32.totalorder %s24, 1
    %p257 = por %p255, %p256
    %p259 = scmp.ne.s32.totalorder %s244, %s258
    %p260 = scmp.eq.s32.totalorder %s24, 0
    %p261 = por %p259, %p260
    %s263 = sadd.s32 %s262, 1
    %p266 = scmp.eq.s32.totalorder %s18, 1
    %p267 = scmp.ne.s32.totalorder %s262, %s264
    %p268 = scmp.eq.s32.totalorder %s18, 0
    %p269 = por %p267, %p268
    %p270 = scmp.ne.s32.totalorder %s262, %s264
    %p271 = scmp.eq.s32.totalorder %s23, 1
    %p272 = por %p270, %p271
    %p273 = scmp.ne.s32.totalorder %s264, %s265
    %p274 = scmp.eq.s32.totalorder %s23, 0
    %p275 = por %p273, %p274
    %p276 = scmp.ne.s32.totalorder %s264, %s265
    %p277 = scmp.eq.s32.totalorder %s24, 1
    %p278 = por %p276, %p277
    %p280 = scmp.ne.s32.totalorder %s265, %s279
    %p281 = scmp.eq.s32.totalorder %s24, 0
    %p282 = por %p280, %p281
    %s283 = ssub.s32 %s18, %s25
    %p284 = scmp.eq.s32.totalorder %s283, 0
    %s286 = sadd.s32 %s285, 1
    %s287 = scalar_select %p284, %s285, %s286
    %p290 = pneg %p284
    %p291 = scmp.eq.s32.totalorder %s18, 1
    %p292 = por %p290, %p291
    %p293 = scmp.ne.s32.totalorder %s285, %s288
    %p294 = scmp.eq.s32.totalorder %s18, 0
    %p295 = por %p293, %p294
    %p296 = scmp.ne.s32.totalorder %s285, %s288
    %p297 = scmp.eq.s32.totalorder %s23, 1
    %p298 = por %p296, %p297
    %p299 = scmp.ne.s32.totalorder %s288, %s289
    %p300 = scmp.eq.s32.totalorder %s23, 0
    %p301 = por %p299, %p300
    %p302 = scmp.ne.s32.totalorder %s288, %s289
    %p303 = scmp.eq.s32.totalorder %s24, 1
    %p304 = por %p302, %p303
    %p306 = scmp.ne.s32.totalorder %s289, %s305
    %p307 = scmp.eq.s32.totalorder %s24, 0
    %p308 = por %p306, %p307
    %p309 = scmp.le.s32.totalorder 1, %s18
    %p310 = scmp.lt.s32.totalorder %s18, 3
    %p311 = pnand %p309, %p310
    %p312 = pneg %p311
    // Predicated region
    $region9: #{bottleneck3d_pallas.1} parent=5 // pred_check
      _
    $region10: #{bottleneck3d_pallas.1} parent=5 // pred_check_branch
      %314 = sbr.rel (%p311) target = $region12
    $region11: #{bottleneck3d_pallas.1} parent=5 // pred_region
      %s315 = ssub.s32 %s18, 1
      // Predicated region
      $region13: #{bottleneck3d_pallas.1} parent=11 // pred_check
        %p316 = pneg %p65
      $region14: #{bottleneck3d_pallas.1} parent=11 // pred_check_branch
        %318 = sbr.rel (%p316) target = $region16
      $region15: #{bottleneck3d_pallas.1} parent=11 // pred_region
        _
      $region16: #{bottleneck3d_pallas.1} parent=11 // pred_fallthru
        _
      // Predicated region
      $region17: #{bottleneck3d_pallas.1} parent=11 // pred_check
        %p319 = pneg %p86
      $region18: #{bottleneck3d_pallas.1} parent=11 // pred_check_branch
        %321 = sbr.rel (%p319) target = $region20
      $region19: #{bottleneck3d_pallas.1} parent=11 // pred_region
        _
      $region20: #{bottleneck3d_pallas.1} parent=11 // pred_fallthru
        _
      // Predicated region
      $region21: #{bottleneck3d_pallas.1} parent=11 // pred_check
        %p322 = pneg %p107
      $region22: #{bottleneck3d_pallas.1} parent=11 // pred_check_branch
        %324 = sbr.rel (%p322) target = $region24
      $region23: #{bottleneck3d_pallas.1} parent=11 // pred_region
        _
      $region24: #{bottleneck3d_pallas.1} parent=11 // pred_fallthru
        _
      // Predicated region
      $region25: #{bottleneck3d_pallas.1} parent=11 // pred_check
        %p325 = pneg %p128
      $region26: #{bottleneck3d_pallas.1} parent=11 // pred_check_branch
        %327 = sbr.rel (%p325) target = $region28
      $region27: #{bottleneck3d_pallas.1} parent=11 // pred_region
        _
      $region28: #{bottleneck3d_pallas.1} parent=11 // pred_fallthru
        _
      // Predicated region
      $region29: #{bottleneck3d_pallas.1} parent=11 // pred_check
        %p328 = pneg %p149
      $region30: #{bottleneck3d_pallas.1} parent=11 // pred_check_branch
        %330 = sbr.rel (%p328) target = $region32
      $region31: #{bottleneck3d_pallas.1} parent=11 // pred_region
        _
      $region32: #{bottleneck3d_pallas.1} parent=11 // pred_fallthru
        _
      // Predicated region
      $region33: #{bottleneck3d_pallas.1} parent=11 // pred_check
        %p331 = pneg %p170
      $region34: #{bottleneck3d_pallas.1} parent=11 // pred_check_branch
        %333 = sbr.rel (%p331) target = $region36
      $region35: #{bottleneck3d_pallas.1} parent=11 // pred_region
        _
      $region36: #{bottleneck3d_pallas.1} parent=11 // pred_fallthru
        _
      // Predicated region
      $region37: #{bottleneck3d_pallas.1} parent=11 // pred_check
        %p334 = pneg %p191
      $region38: #{bottleneck3d_pallas.1} parent=11 // pred_check_branch
        %336 = sbr.rel (%p334) target = $region40
      $region39: #{bottleneck3d_pallas.1} parent=11 // pred_region
        _
      $region40: #{bottleneck3d_pallas.1} parent=11 // pred_fallthru
        _
      // Predicated region
      $region41: #{bottleneck3d_pallas.1} parent=11 // pred_check
        %p337 = pneg %p212
      $region42: #{bottleneck3d_pallas.1} parent=11 // pred_check_branch
        %339 = sbr.rel (%p337) target = $region44
      $region43: #{bottleneck3d_pallas.1} parent=11 // pred_region
        _
      $region44: #{bottleneck3d_pallas.1} parent=11 // pred_fallthru
        _
      // Predicated region
      $region45: #{bottleneck3d_pallas.1} parent=11 // pred_check
        %p340 = pneg %p233
      $region46: #{bottleneck3d_pallas.1} parent=11 // pred_check_branch
        %342 = sbr.rel (%p340) target = $region48
      $region47: #{bottleneck3d_pallas.1} parent=11 // pred_region
        _
      $region48: #{bottleneck3d_pallas.1} parent=11 // pred_fallthru
        _
      // Predicated region
      $region49: #{bottleneck3d_pallas.1} parent=11 // pred_check
        %p343 = pneg %p254
      $region50: #{bottleneck3d_pallas.1} parent=11 // pred_check_branch
        %345 = sbr.rel (%p343) target = $region52
      $region51: #{bottleneck3d_pallas.1} parent=11 // pred_region
        _
      $region52: #{bottleneck3d_pallas.1} parent=11 // pred_fallthru
        _
      // Predicated region
      $region53: #{bottleneck3d_pallas.1} parent=11 // pred_check
        %p346 = pneg %p275
      $region54: #{bottleneck3d_pallas.1} parent=11 // pred_check_branch
        %348 = sbr.rel (%p346) target = $region56
      $region55: #{bottleneck3d_pallas.1} parent=11 // pred_region
        _
      $region56: #{bottleneck3d_pallas.1} parent=11 // pred_fallthru
        _
    $region12: #{bottleneck3d_pallas.1} parent=5 // pred_fallthru
      _
    %p349 = scmp.lt.s32.totalorder %s18, 2
    // Predicated region
    $region57: #{bottleneck3d_pallas.1} parent=5 // pred_check
      %p350 = pneg %p349
    $region58: #{bottleneck3d_pallas.1} parent=5 // pred_check_branch
      %352 = sbr.rel (%p350) target = $region60
    $region59: #{bottleneck3d_pallas.1} parent=5 // pred_region
      // Predicated region
      $region61: #{bottleneck3d_pallas.1} parent=59 // pred_check
        %p353 = pneg %p38
      $region62: #{bottleneck3d_pallas.1} parent=59 // pred_check_branch
        %355 = sbr.rel (%p353) target = $region64
      $region63: #{bottleneck3d_pallas.1} parent=59 // pred_region
        %p356 = scmp.lt.s32.totalorder %s18, 1
        %s357 = scalar_select %p356, %s18, 1
        %s358 = smul.addr %s357, 8
        %s359 = smul.addr %s358, 4
        %s360 = scalar_lea.vmem %s0, %s359
      $region64: #{bottleneck3d_pallas.1} parent=59 // pred_fallthru
        _
    $region60: #{bottleneck3d_pallas.1} parent=5 // pred_fallthru
      _
    %p361 = scmp.le.s32.totalorder 1, %s18
    %p362 = scmp.lt.s32.totalorder %s18, 3
    %p363 = pnand %p361, %p362
    %p364 = pneg %p363
    // Predicated region
    $region65: #{bottleneck3d_pallas.1} parent=5 // pred_check
      _
    $region66: #{bottleneck3d_pallas.1} parent=5 // pred_check_branch
      %366 = sbr.rel (%p363) target = $region68
    $region67: #{bottleneck3d_pallas.1} parent=5 // pred_region
      %s367 = ssub.s32 %s18, 1
      %p368 = scmp.lt.s32.totalorder %s23, 1
      %s369 = scalar_select %p368, %s23, 1
      %s370 = smul.addr %s369, 8
      %s371 = smul.addr %s370, 4
      %s372 = scalar_lea.vmem %s0, %s371
      %p373 = pneg %p44
      %p374 = pneg %p41
      %p375 = pneg %p65
      %p376 = pneg %p62
      %p377 = pneg %p86
      %p378 = pneg %p83
      %p379 = pneg %p107
      %p380 = pneg %p104
      %p381 = pneg %p128
      %p382 = pneg %p125
      %p383 = pneg %p149
      %p384 = pneg %p146
      %p385 = pneg %p170
      %p386 = pneg %p167
      %p387 = pneg %p191
      %p388 = pneg %p188
      %p389 = pneg %p212
      %p390 = pneg %p209
      %p391 = pneg %p233
      %p392 = pneg %p230
      %p393 = pneg %p254
      %p394 = pneg %p251
      %p395 = pneg %p275
      %p396 = pneg %p272
      %p397 = pneg %p301
      %p398 = pneg %p298
      %p399 = scmp.lt.s32.totalorder %s23, 1
      %s400 = scalar_select %p399, %s23, 1
      %s401 = smul.addr %s400, 8
      %s402 = smul.addr %s401, 8
      %s403 = scalar_lea.vmem %s12, %s402
      %p404 = scmp.lt.s32.totalorder %s23, 1
      %s405 = scalar_select %p404, %s23, 1
      %s406 = smul.addr %s405, 8
      %s407 = smul.addr %s406, 4
      %s408 = scalar_lea.vmem %s0, %s407
      %p409 = scmp.lt.s32.totalorder %s23, 1
      %s410 = scalar_select %p409, %s23, 1
      %s411 = smul.addr %s410, 8
      %s412 = smul.addr %s411, 8
      %s413 = scalar_lea.vmem %s12, %s412
      %v415 = vld [vmem:[%s1] sm:$0x3f]
      %v416 = vld [vmem:[%s1 + $0x8] sm:$0x3f]
      %v417 = vld [vmem:[%s1 + $0x10] sm:$0x3f]
      %v418 = vld [vmem:[%s1 + $0x18] sm:$0x3f]
      %v419 = vld [vmem:[%s408] sm:$0xff]
      %v420 = vld [vmem:[%s408 + $0x8] sm:$0xff]
      %v421 = vld [vmem:[%s408 + $0x10] sm:$0xff]
      %v422 = vld [vmem:[%s408 + $0x18] sm:$0xff]
      %v423 = vld [vmem:[%s2] sm:$0xf]
      %v424 = vld [vmem:[%s3] sm:$0xff]
      %426 = vset.pattern.permute.xlu0 0
      %427 = vperm.xlu0 %426, %v424
      %v428 = vpop.permute.xlu0 %427
      %v434 = vunpack.c.l.b16 %v419
      %v435 = vunpack.c.h.b16 %v419
      %v436 = vunpack.c.l.b16 %v420
      %v437 = vunpack.c.h.b16 %v420
      %v438 = vunpack.c.l.b16 %v421
      %v439 = vunpack.c.h.b16 %v421
      %v440 = vunpack.c.l.b16 %v422
      %v441 = vunpack.c.h.b16 %v422
      %v442 = vpack.c.b16 %v438, %v434
      %v443 = vpack.c.b16 %v439, %v435
      %v444 = vpack.c.b16 %v440, %v436
      %v445 = vpack.c.b16 %v441, %v437
      %vm450 = vcmask 130048
      %v452 = vsel %vm450, %v423, 0
      %454 = vmatpush.bf16.msra.mxu0 0
      %455 = vmatpush.bf16.msra.mxu0 0
      %456 = vmatpush.bf16.msra.mxu0 0
      %457 = vmatpush.bf16.msra.mxu0 0
      %458 = vmatpush.bf16.msra.mxu0 0
      %459 = vmatpush.bf16.msra.mxu0 0
      %460 = vmatpush.bf16.msra.mxu0 0
      %461 = vmatpush.bf16.msra.mxu0 %v442
      %462 = vmatmul.bf16.gmra.mxu0 %v452
      %v463 = vpop.f32.mrf.mxu0
      %v464 = vadd.f32 %v428, %v463
      %v465 = vpop.f32.mrf.mxu0
      %466 = vdwg.mxu0
      %467 = vmatpush.bf16.msra.mxu0 0
      %468 = vmatpush.bf16.msra.mxu0 0
      %469 = vmatpush.bf16.msra.mxu0 0
      %470 = vmatpush.bf16.msra.mxu0 0
      %471 = vmatpush.bf16.msra.mxu0 0
      %472 = vmatpush.bf16.msra.mxu0 0
      %473 = vmatpush.bf16.msra.mxu0 0
      %474 = vmatpush.bf16.msra.mxu0 %v443
      %475 = vmatmul.bf16.gmra.mxu0 %v452
      %v476 = vpop.f32.mrf.mxu0
      %v477 = vadd.f32 %v428, %v476
      %v478 = vpop.f32.mrf.mxu0
      %479 = vdwg.mxu0
      %480 = vmatpush.bf16.msra.mxu0 0
      %481 = vmatpush.bf16.msra.mxu0 0
      %482 = vmatpush.bf16.msra.mxu0 0
      %483 = vmatpush.bf16.msra.mxu0 0
      %484 = vmatpush.bf16.msra.mxu0 0
      %485 = vmatpush.bf16.msra.mxu0 0
      %486 = vmatpush.bf16.msra.mxu0 0
      %487 = vmatpush.bf16.msra.mxu0 %v444
      %488 = vmatmul.bf16.gmra.mxu0 %v452
      %v489 = vpop.f32.mrf.mxu0
      %v490 = vadd.f32 %v428, %v489
      %v491 = vpop.f32.mrf.mxu0
      %492 = vdwg.mxu0
      %493 = vmatpush.bf16.msra.mxu0 0
      %494 = vmatpush.bf16.msra.mxu0 0
      %495 = vmatpush.bf16.msra.mxu0 0
      %496 = vmatpush.bf16.msra.mxu0 0
      %497 = vmatpush.bf16.msra.mxu0 0
      %498 = vmatpush.bf16.msra.mxu0 0
      %499 = vmatpush.bf16.msra.mxu0 0
      %500 = vmatpush.bf16.msra.mxu0 %v445
      %501 = vmatmul.bf16.gmra.mxu0 %v452
      %v502 = vpop.f32.mrf.mxu0
      %v503 = vadd.f32 %v428, %v502
      %v504 = vpop.f32.mrf.mxu0
      %505 = vdwg.mxu0
      %v506 = vmax.f32 %v464, 0.0
      %v507 = vmax.f32 %v477, 0.0
      %v508 = vmax.f32 %v490, 0.0
      %v509 = vmax.f32 %v503, 0.0
      %510 = vrot.lane.b32.xlu0 %v506, 1
      %v511 = vpop.permute.xlu0 %510
      %512 = vrot.lane.b32.xlu0 %v507, 1
      %v513 = vpop.permute.xlu0 %512
      %514 = vrot.lane.b32.xlu0 %v508, 1
      %v515 = vpop.permute.xlu0 %514
      %516 = vrot.lane.b32.xlu0 %v509, 1
      %v517 = vpop.permute.xlu0 %516
      %v518 = vlaneseq
      %v519 = vand.u32 %v518, 127
      %vm520 = vcmp.lt.s32.totalorder %v519, 1
      %v521 = vsel %vm520, %v515, %v517
      %v522 = vsel %vm520, %v513, %v515
      %v523 = vsel %vm520, %v511, %v513
      %v524 = vsel %vm520, %v517, %v511
      %v525 = vperm.slane %v415, 0
      %v526 = vperm.slane %v416, 0
      %v527 = vperm.slane %v417, 0
      %v528 = vperm.slane %v418, 0
      %v529 = vmul.f32 %v524, %v525
      %v530 = vmul.f32 %v523, %v526
      %v531 = vmul.f32 %v522, %v527
      %v532 = vmul.f32 %v521, %v528
      %533 = vrot.lane.b32.xlu0 %v506, 127
      %v534 = vpop.permute.xlu0 %533
      %535 = vrot.lane.b32.xlu0 %v507, 127
      %v536 = vpop.permute.xlu0 %535
      %537 = vrot.lane.b32.xlu0 %v508, 127
      %v538 = vpop.permute.xlu0 %537
      %539 = vrot.lane.b32.xlu0 %v509, 127
      %v540 = vpop.permute.xlu0 %539
      %vm541 = vcmp.lt.s32.totalorder %v519, 127
      %v542 = vsel %vm541, %v538, %v540
      %v543 = vsel %vm541, %v536, %v538
      %v544 = vsel %vm541, %v534, %v536
      %v545 = vsel %vm541, %v540, %v534
      %v546 = vperm.slane %v415, 1
      %v547 = vperm.slane %v416, 1
      %v548 = vperm.slane %v417, 1
      %v549 = vperm.slane %v418, 1
      %v550 = vmul.f32 %v544, %v546
      %v551 = vmul.f32 %v543, %v547
      %v552 = vmul.f32 %v542, %v548
      %v553 = vmul.f32 %v545, %v549
      %v554 = vpack.c.bf16 %v506, %v529
      %v555 = vpack.c.bf16 %v507, %v530
      %v556 = vpack.c.bf16 %v508, %v531
      %v557 = vpack.c.bf16 %v509, %v532
      %v558 = vpack.c.bf16 %v550, %v550
      %v559 = vpack.c.bf16 %v551, %v551
      %v560 = vpack.c.bf16 %v552, %v552
      %v561 = vpack.c.bf16 %v553, %v553
      %v562 = vld [vmem:[%s4] sm:$0xf]
      %v563 = vld [vmem:[%s5] sm:$0xff]
      %565 = vset.pattern.permute.xlu0 0
      %566 = vperm.xlu0 %565, %v563
      %v567 = vpop.permute.xlu0 %566
      %vm569 = vcmask 195584
      %v571 = vsel %vm569, %v562, 0
      %vm573 = vcmask 1043456
      %v575 = vsel %vm573, %v558, 0
      %v578 = vsel %vm573, %v559, 0
      %v581 = vsel %vm573, %v560, 0
      %v584 = vsel %vm573, %v561, 0
      %586 = vmatpush.bf16.msra.mxu0 0
      %587 = vmatpush.bf16.msra.mxu0 0
      %588 = vmatpush.bf16.msra.mxu0 0
      %589 = vmatpush.bf16.msra.mxu0 0
      %590 = vmatpush.bf16.msra.mxu0 0
      %591 = vmatpush.bf16.msra.mxu0 0
      %592 = vmatpush.bf16.msra.mxu0 %v575
      %593 = vmatpush.bf16.msra.mxu0 %v554
      %594 = vmatmul.bf16.gmra.mxu0 %v571
      %v595 = vpop.f32.mrf.mxu0
      %v596 = vadd.f32 %v567, %v595
      %v597 = vpop.f32.mrf.mxu0
      %598 = vdwg.mxu0
      %599 = vmatpush.bf16.msra.mxu0 0
      %600 = vmatpush.bf16.msra.mxu0 0
      %601 = vmatpush.bf16.msra.mxu0 0
      %602 = vmatpush.bf16.msra.mxu0 0
      %603 = vmatpush.bf16.msra.mxu0 0
      %604 = vmatpush.bf16.msra.mxu0 0
      %605 = vmatpush.bf16.msra.mxu0 %v578
      %606 = vmatpush.bf16.msra.mxu0 %v555
      %607 = vmatmul.bf16.gmra.mxu0 %v571
      %v608 = vpop.f32.mrf.mxu0
      %v609 = vadd.f32 %v567, %v608
      %v610 = vpop.f32.mrf.mxu0
      %611 = vdwg.mxu0
      %612 = vmatpush.bf16.msra.mxu0 0
      %613 = vmatpush.bf16.msra.mxu0 0
      %614 = vmatpush.bf16.msra.mxu0 0
      %615 = vmatpush.bf16.msra.mxu0 0
      %616 = vmatpush.bf16.msra.mxu0 0
      %617 = vmatpush.bf16.msra.mxu0 0
      %618 = vmatpush.bf16.msra.mxu0 %v581
      %619 = vmatpush.bf16.msra.mxu0 %v556
      %620 = vmatmul.bf16.gmra.mxu0 %v571
      %v621 = vpop.f32.mrf.mxu0
      %v622 = vadd.f32 %v567, %v621
      %v623 = vpop.f32.mrf.mxu0
      %624 = vdwg.mxu0
      %625 = vmatpush.bf16.msra.mxu0 0
      %626 = vmatpush.bf16.msra.mxu0 0
      %627 = vmatpush.bf16.msra.mxu0 0
      %628 = vmatpush.bf16.msra.mxu0 0
      %629 = vmatpush.bf16.msra.mxu0 0
      %630 = vmatpush.bf16.msra.mxu0 0
      %631 = vmatpush.bf16.msra.mxu0 %v584
      %632 = vmatpush.bf16.msra.mxu0 %v557
      %633 = vmatmul.bf16.gmra.mxu0 %v571
      %v634 = vpop.f32.mrf.mxu0
      %v635 = vadd.f32 %v567, %v634
      %v636 = vpop.f32.mrf.mxu0
      %637 = vdwg.mxu0
      %v638 = vmax.f32 %v596, 0.0
      %v639 = vmax.f32 %v609, 0.0
      %v640 = vmax.f32 %v622, 0.0
      %v641 = vmax.f32 %v635, 0.0
      %642 = vrot.lane.b32.xlu0 %v638, 8
      %v643 = vpop.permute.xlu0 %642
      %644 = vrot.lane.b32.xlu0 %v639, 8
      %v645 = vpop.permute.xlu0 %644
      %646 = vrot.lane.b32.xlu0 %v640, 8
      %v647 = vpop.permute.xlu0 %646
      %648 = vrot.lane.b32.xlu0 %v641, 8
      %v649 = vpop.permute.xlu0 %648
      %vm650 = vcmp.lt.s32.totalorder %v519, 8
      %v651 = vsel %vm650, %v647, %v649
      %v652 = vsel %vm650, %v645, %v647
      %v653 = vsel %vm650, %v643, %v645
      %v654 = vsel %vm650, %v649, %v643
      %v655 = vperm.slane %v415, 2
      %v656 = vperm.slane %v416, 2
      %v657 = vperm.slane %v417, 2
      %v658 = vperm.slane %v418, 2
      %v659 = vmul.f32 %v654, %v655
      %v660 = vmul.f32 %v653, %v656
      %v661 = vmul.f32 %v652, %v657
      %v662 = vmul.f32 %v651, %v658
      %663 = vrot.lane.b32.xlu0 %v638, 120
      %v664 = vpop.permute.xlu0 %663
      %665 = vrot.lane.b32.xlu0 %v639, 120
      %v666 = vpop.permute.xlu0 %665
      %667 = vrot.lane.b32.xlu0 %v640, 120
      %v668 = vpop.permute.xlu0 %667
      %669 = vrot.lane.b32.xlu0 %v641, 120
      %v670 = vpop.permute.xlu0 %669
      %vm671 = vcmp.lt.s32.totalorder %v519, 120
      %v672 = vsel %vm671, %v668, %v670
      %v673 = vsel %vm671, %v666, %v668
      %v674 = vsel %vm671, %v664, %v666
      %v675 = vsel %vm671, %v670, %v664
      %v676 = vperm.slane %v415, 3
      %v677 = vperm.slane %v416, 3
      %v678 = vperm.slane %v417, 3
      %v679 = vperm.slane %v418, 3
      %v680 = vmul.f32 %v674, %v676
      %v681 = vmul.f32 %v673, %v677
      %v682 = vmul.f32 %v672, %v678
      %v683 = vmul.f32 %v675, %v679
      %v684 = vpack.c.bf16 %v638, %v659
      %v685 = vpack.c.bf16 %v639, %v660
      %v686 = vpack.c.bf16 %v640, %v661
      %v687 = vpack.c.bf16 %v641, %v662
      %v688 = vpack.c.bf16 %v680, %v680
      %v689 = vpack.c.bf16 %v681, %v681
      %v690 = vpack.c.bf16 %v682, %v682
      %v691 = vpack.c.bf16 %v683, %v683
      %v692 = vld [vmem:[%s6] sm:$0xf]
      %v693 = vld [vmem:[%s7] sm:$0xff]
      %695 = vset.pattern.permute.xlu0 0
      %696 = vperm.xlu0 %695, %v693
      %v697 = vpop.permute.xlu0 %696
      %v700 = vsel %vm569, %v692, 0
      %v703 = vsel %vm573, %v688, 0
      %v706 = vsel %vm573, %v689, 0
      %v709 = vsel %vm573, %v690, 0
      %v712 = vsel %vm573, %v691, 0
      %714 = vmatpush.bf16.msra.mxu0 0
      %715 = vmatpush.bf16.msra.mxu0 0
      %716 = vmatpush.bf16.msra.mxu0 0
      %717 = vmatpush.bf16.msra.mxu0 0
      %718 = vmatpush.bf16.msra.mxu0 0
      %719 = vmatpush.bf16.msra.mxu0 0
      %720 = vmatpush.bf16.msra.mxu0 %v703
      %721 = vmatpush.bf16.msra.mxu0 %v684
      %722 = vmatmul.bf16.gmra.mxu0 %v700
      %v723 = vpop.f32.mrf.mxu0
      %v724 = vadd.f32 %v697, %v723
      %v725 = vpop.f32.mrf.mxu0
      %726 = vdwg.mxu0
      %727 = vmatpush.bf16.msra.mxu0 0
      %728 = vmatpush.bf16.msra.mxu0 0
      %729 = vmatpush.bf16.msra.mxu0 0
      %730 = vmatpush.bf16.msra.mxu0 0
      %731 = vmatpush.bf16.msra.mxu0 0
      %732 = vmatpush.bf16.msra.mxu0 0
      %733 = vmatpush.bf16.msra.mxu0 %v706
      %734 = vmatpush.bf16.msra.mxu0 %v685
      %735 = vmatmul.bf16.gmra.mxu0 %v700
      %v736 = vpop.f32.mrf.mxu0
      %v737 = vadd.f32 %v697, %v736
      %v738 = vpop.f32.mrf.mxu0
      %739 = vdwg.mxu0
      %740 = vmatpush.bf16.msra.mxu0 0
      %741 = vmatpush.bf16.msra.mxu0 0
      %742 = vmatpush.bf16.msra.mxu0 0
      %743 = vmatpush.bf16.msra.mxu0 0
      %744 = vmatpush.bf16.msra.mxu0 0
      %745 = vmatpush.bf16.msra.mxu0 0
      %746 = vmatpush.bf16.msra.mxu0 %v709
      %747 = vmatpush.bf16.msra.mxu0 %v686
      %748 = vmatmul.bf16.gmra.mxu0 %v700
      %v749 = vpop.f32.mrf.mxu0
      %v750 = vadd.f32 %v697, %v749
      %v751 = vpop.f32.mrf.mxu0
      %752 = vdwg.mxu0
      %753 = vmatpush.bf16.msra.mxu0 0
      %754 = vmatpush.bf16.msra.mxu0 0
      %755 = vmatpush.bf16.msra.mxu0 0
      %756 = vmatpush.bf16.msra.mxu0 0
      %757 = vmatpush.bf16.msra.mxu0 0
      %758 = vmatpush.bf16.msra.mxu0 0
      %759 = vmatpush.bf16.msra.mxu0 %v712
      %760 = vmatpush.bf16.msra.mxu0 %v687
      %761 = vmatmul.bf16.gmra.mxu0 %v700
      %v762 = vpop.f32.mrf.mxu0
      %v763 = vadd.f32 %v697, %v762
      %v764 = vpop.f32.mrf.mxu0
      %765 = vdwg.mxu0
      %v766 = vadd.f32 %v724, %v596
      %v767 = vadd.f32 %v737, %v609
      %v768 = vadd.f32 %v750, %v622
      %v769 = vadd.f32 %v763, %v635
      %v770 = vadd.f32 %v596, %v766
      %v771 = vadd.f32 %v609, %v767
      %v772 = vadd.f32 %v622, %v768
      %v773 = vadd.f32 %v635, %v769
      %v774 = vmax.f32 %v766, 0.0
      %v775 = vmax.f32 %v767, 0.0
      %v776 = vmax.f32 %v768, 0.0
      %v777 = vmax.f32 %v769, 0.0
      %778 = vrot.lane.b32.xlu0 %v774, 64
      %v779 = vpop.permute.xlu0 %778
      %780 = vrot.lane.b32.xlu0 %v775, 64
      %v781 = vpop.permute.xlu0 %780
      %782 = vrot.lane.b32.xlu0 %v776, 64
      %v783 = vpop.permute.xlu0 %782
      %784 = vrot.lane.b32.xlu0 %v777, 64
      %v785 = vpop.permute.xlu0 %784
      %vm786 = vcmp.lt.s32.totalorder %v519, 64
      %v787 = vsel %vm786, %v783, %v785
      %v788 = vsel %vm786, %v781, %v783
      %v789 = vsel %vm786, %v779, %v781
      %v790 = vsel %vm786, %v785, %v779
      %v791 = vperm.slane %v415, 4
      %v792 = vperm.slane %v416, 4
      %v793 = vperm.slane %v417, 4
      %v794 = vperm.slane %v418, 4
      %v795 = vmul.f32 %v790, %v791
      %v796 = vmul.f32 %v789, %v792
      %v797 = vmul.f32 %v788, %v793
      %v798 = vmul.f32 %v787, %v794
      %v799 = vperm.slane %v415, 5
      %v800 = vperm.slane %v416, 5
      %v801 = vperm.slane %v417, 5
      %v802 = vperm.slane %v418, 5
      %v803 = vmul.f32 %v789, %v799
      %v804 = vmul.f32 %v788, %v800
      %v805 = vmul.f32 %v787, %v801
      %v806 = vmul.f32 %v790, %v802
      %v807 = vpack.c.bf16 %v774, %v795
      %v808 = vpack.c.bf16 %v775, %v796
      %v809 = vpack.c.bf16 %v776, %v797
      %v810 = vpack.c.bf16 %v777, %v798
      %v811 = vpack.c.bf16 %v803, %v803
      %v812 = vpack.c.bf16 %v804, %v804
      %v813 = vpack.c.bf16 %v805, %v805
      %v814 = vpack.c.bf16 %v806, %v806
      %v815 = vld [vmem:[%s8] sm:$0xf]
      %v816 = vld [vmem:[%s9] sm:$0xff]
      %818 = vset.pattern.permute.xlu0 0
      %819 = vperm.xlu0 %818, %v816
      %v820 = vpop.permute.xlu0 %819
      %v823 = vsel %vm569, %v815, 0
      %v826 = vsel %vm573, %v811, 0
      %v829 = vsel %vm573, %v812, 0
      %v832 = vsel %vm573, %v813, 0
      %v835 = vsel %vm573, %v814, 0
      %837 = vmatpush.bf16.msra.mxu0 0
      %838 = vmatpush.bf16.msra.mxu0 0
      %839 = vmatpush.bf16.msra.mxu0 0
      %840 = vmatpush.bf16.msra.mxu0 0
      %841 = vmatpush.bf16.msra.mxu0 0
      %842 = vmatpush.bf16.msra.mxu0 0
      %843 = vmatpush.bf16.msra.mxu0 %v826
      %844 = vmatpush.bf16.msra.mxu0 %v807
      %845 = vmatmul.bf16.gmra.mxu0 %v823
      %v846 = vpop.f32.mrf.mxu0
      %v847 = vadd.f32 %v820, %v846
      %v848 = vpop.f32.mrf.mxu0
      %849 = vdwg.mxu0
      %850 = vmatpush.bf16.msra.mxu0 0
      %851 = vmatpush.bf16.msra.mxu0 0
      %852 = vmatpush.bf16.msra.mxu0 0
      %853 = vmatpush.bf16.msra.mxu0 0
      %854 = vmatpush.bf16.msra.mxu0 0
      %855 = vmatpush.bf16.msra.mxu0 0
      %856 = vmatpush.bf16.msra.mxu0 %v829
      %857 = vmatpush.bf16.msra.mxu0 %v808
      %858 = vmatmul.bf16.gmra.mxu0 %v823
      %v859 = vpop.f32.mrf.mxu0
      %v860 = vadd.f32 %v820, %v859
      %v861 = vpop.f32.mrf.mxu0
      %862 = vdwg.mxu0
      %863 = vmatpush.bf16.msra.mxu0 0
      %864 = vmatpush.bf16.msra.mxu0 0
      %865 = vmatpush.bf16.msra.mxu0 0
      %866 = vmatpush.bf16.msra.mxu0 0
      %867 = vmatpush.bf16.msra.mxu0 0
      %868 = vmatpush.bf16.msra.mxu0 0
      %869 = vmatpush.bf16.msra.mxu0 %v832
      %870 = vmatpush.bf16.msra.mxu0 %v809
      %871 = vmatmul.bf16.gmra.mxu0 %v823
      %v872 = vpop.f32.mrf.mxu0
      %v873 = vadd.f32 %v820, %v872
      %v874 = vpop.f32.mrf.mxu0
      %875 = vdwg.mxu0
      %876 = vmatpush.bf16.msra.mxu0 0
      %877 = vmatpush.bf16.msra.mxu0 0
      %878 = vmatpush.bf16.msra.mxu0 0
      %879 = vmatpush.bf16.msra.mxu0 0
      %880 = vmatpush.bf16.msra.mxu0 0
      %881 = vmatpush.bf16.msra.mxu0 0
      %882 = vmatpush.bf16.msra.mxu0 %v835
      %883 = vmatpush.bf16.msra.mxu0 %v810
      %884 = vmatmul.bf16.gmra.mxu0 %v823
      %v885 = vpop.f32.mrf.mxu0
      %v886 = vadd.f32 %v820, %v885
      %v887 = vpop.f32.mrf.mxu0
      %888 = vdwg.mxu0
      %v889 = vadd.f32 %v847, %v770
      %v890 = vadd.f32 %v860, %v771
      %v891 = vadd.f32 %v873, %v772
      %v892 = vadd.f32 %v886, %v773
      %v893 = vmax.f32 %v889, 0.0
      %v894 = vmax.f32 %v890, 0.0
      %v895 = vmax.f32 %v891, 0.0
      %v896 = vmax.f32 %v892, 0.0
      %v897 = vpack.c.bf16 %v893, %v893
      %v898 = vpack.c.bf16 %v894, %v894
      %v899 = vpack.c.bf16 %v895, %v895
      %v900 = vpack.c.bf16 %v896, %v896
      %v901 = vld [vmem:[%s10] sm:$0xf]
      %v902 = vld [vmem:[%s10 + $0x4] sm:$0xf]
      %v903 = vld [vmem:[%s11] sm:$0xff]
      %v904 = vld [vmem:[%s11 + $0x8] sm:$0xff]
      %906 = vset.pattern.permute.xlu0 0
      %907 = vperm.xlu0 %906, %v903
      %v908 = vpop.permute.xlu0 %907
      %911 = vset.pattern.permute.xlu0 0
      %912 = vperm.xlu0 %911, %v904
      %v913 = vpop.permute.xlu0 %912
      %v917 = vunpack.c.l.b16 %v901
      %v918 = vunpack.c.l.b16 %v902
      %v919 = vpack.c.b16 %v918, %v917
      %vm920 = vcmask 64512
      %v922 = vsel %vm920, %v919, 0
      %v925 = vsel %vm573, %v897, 0
      %v928 = vsel %vm573, %v898, 0
      %v931 = vsel %vm573, %v899, 0
      %v934 = vsel %vm573, %v900, 0
      %936 = vmatpush.bf16.msra.mxu0 0
      %937 = vmatpush.bf16.msra.mxu0 0
      %938 = vmatpush.bf16.msra.mxu0 0
      %939 = vmatpush.bf16.msra.mxu0 0
      %940 = vmatpush.bf16.msra.mxu0 0
      %941 = vmatpush.bf16.msra.mxu0 0
      %942 = vmatpush.bf16.msra.mxu0 0
      %943 = vmatpush.bf16.msra.mxu0 %v925
      %944 = vmatmul.bf16.gmra.mxu0 %v922
      %v945 = vpop.f32.mrf.mxu0
      %v946 = vadd.f32 %v908, %v945
      %v947 = vpop.f32.mrf.mxu0
      %v948 = vadd.f32 %v913, %v947
      %949 = vdwg.mxu0
      %950 = vmatpush.bf16.msra.mxu0 0
      %951 = vmatpush.bf16.msra.mxu0 0
      %952 = vmatpush.bf16.msra.mxu0 0
      %953 = vmatpush.bf16.msra.mxu0 0
      %954 = vmatpush.bf16.msra.mxu0 0
      %955 = vmatpush.bf16.msra.mxu0 0
      %956 = vmatpush.bf16.msra.mxu0 0
      %957 = vmatpush.bf16.msra.mxu0 %v928
      %958 = vmatmul.bf16.gmra.mxu0 %v922
      %v959 = vpop.f32.mrf.mxu0
      %v960 = vadd.f32 %v908, %v959
      %v961 = vpop.f32.mrf.mxu0
      %v962 = vadd.f32 %v913, %v961
      %963 = vdwg.mxu0
      %964 = vmatpush.bf16.msra.mxu0 0
      %965 = vmatpush.bf16.msra.mxu0 0
      %966 = vmatpush.bf16.msra.mxu0 0
      %967 = vmatpush.bf16.msra.mxu0 0
      %968 = vmatpush.bf16.msra.mxu0 0
      %969 = vmatpush.bf16.msra.mxu0 0
      %970 = vmatpush.bf16.msra.mxu0 0
      %971 = vmatpush.bf16.msra.mxu0 %v931
      %972 = vmatmul.bf16.gmra.mxu0 %v922
      %v973 = vpop.f32.mrf.mxu0
      %v974 = vadd.f32 %v908, %v973
      %v975 = vpop.f32.mrf.mxu0
      %v976 = vadd.f32 %v913, %v975
      %977 = vdwg.mxu0
      %978 = vmatpush.bf16.msra.mxu0 0
      %979 = vmatpush.bf16.msra.mxu0 0
      %980 = vmatpush.bf16.msra.mxu0 0
      %981 = vmatpush.bf16.msra.mxu0 0
      %982 = vmatpush.bf16.msra.mxu0 0
      %983 = vmatpush.bf16.msra.mxu0 0
      %984 = vmatpush.bf16.msra.mxu0 0
      %985 = vmatpush.bf16.msra.mxu0 %v934
      %986 = vmatmul.bf16.gmra.mxu0 %v922
      %v987 = vpop.f32.mrf.mxu0
      %v988 = vadd.f32 %v908, %v987
      %v989 = vpop.f32.mrf.mxu0
      %v990 = vadd.f32 %v913, %v989
      %991 = vdwg.mxu0
      %v992 = vunpack.c.l.bf16 %v419
      %v993 = vunpack.c.h.bf16 %v419
      %v994 = vunpack.c.l.bf16 %v420
      %v995 = vunpack.c.h.bf16 %v420
      %v996 = vunpack.c.l.bf16 %v421
      %v997 = vunpack.c.h.bf16 %v421
      %v998 = vunpack.c.l.bf16 %v422
      %v999 = vunpack.c.h.bf16 %v422
      %v1000 = vadd.f32 %v946, %v992
      %v1001 = vadd.f32 %v960, %v993
      %v1002 = vadd.f32 %v974, %v994
      %v1003 = vadd.f32 %v988, %v995
      %v1004 = vadd.f32 %v948, %v996
      %v1005 = vadd.f32 %v962, %v997
      %v1006 = vadd.f32 %v976, %v998
      %v1007 = vadd.f32 %v990, %v999
      %v1008 = vmax.f32 %v1000, 0.0
      %v1009 = vmax.f32 %v1001, 0.0
      %v1010 = vmax.f32 %v1002, 0.0
      %v1011 = vmax.f32 %v1003, 0.0
      %v1012 = vmax.f32 %v1004, 0.0
      %v1013 = vmax.f32 %v1005, 0.0
      %v1014 = vmax.f32 %v1006, 0.0
      %v1015 = vmax.f32 %v1007, 0.0
      %1016 = vst [vmem:[%s413] sm:$0xff] %v1008
      %1017 = vst [vmem:[%s413 + $0x8] sm:$0xff] %v1009
      %1018 = vst [vmem:[%s413 + $0x10] sm:$0xff] %v1010
      %1019 = vst [vmem:[%s413 + $0x18] sm:$0xff] %v1011
      %1020 = vst [vmem:[%s413 + $0x20] sm:$0xff] %v1012
      %1021 = vst [vmem:[%s413 + $0x28] sm:$0xff] %v1013
      %1022 = vst [vmem:[%s413 + $0x30] sm:$0xff] %v1014
      %1023 = vst [vmem:[%s413 + $0x38] sm:$0xff] %v1015
      %p1024 = scmp.lt.s32.totalorder %s23, 1
      %s1025 = scalar_select %p1024, %s23, 1
      %s1026 = smul.addr %s1025, 8
      %s1027 = smul.addr %s1026, 8
      %s1028 = scalar_lea.vmem %s12, %s1027
      // Predicated region
      $region69: #{bottleneck3d_pallas.1} parent=67 // pred_check
        %p1029 = pneg %p298
      $region70: #{bottleneck3d_pallas.1} parent=67 // pred_check_branch
        %1031 = sbr.rel (%p1029) target = $region72
      $region71: #{bottleneck3d_pallas.1} parent=67 // pred_region
        _
      $region72: #{bottleneck3d_pallas.1} parent=67 // pred_fallthru
        _
    $region68: #{bottleneck3d_pallas.1} parent=5 // pred_fallthru
      _
    %p1032 = scmp.le.s32.totalorder 2, %s18
    // Predicated region
    $region73: #{bottleneck3d_pallas.1} parent=5 // pred_check
      %p1033 = pneg %p1032
    $region74: #{bottleneck3d_pallas.1} parent=5 // pred_check_branch
      %1035 = sbr.rel (%p1033) target = $region76
    $region75: #{bottleneck3d_pallas.1} parent=5 // pred_region
      %s1036 = ssub.s32 %s18, 2
      // Predicated region
      $region77: #{bottleneck3d_pallas.1} parent=75 // pred_check
        %p1037 = pneg %p304
      $region78: #{bottleneck3d_pallas.1} parent=75 // pred_check_branch
        %1039 = sbr.rel (%p1037) target = $region80
      $region79: #{bottleneck3d_pallas.1} parent=75 // pred_region
        %p1040 = scmp.lt.s32.totalorder %s24, 1
        %s1041 = scalar_select %p1040, %s24, 1
        %s1042 = smul.addr %s1041, 8
        %s1043 = smul.addr %s1042, 8
        %s1044 = scalar_lea.vmem %s12, %s1043
      $region80: #{bottleneck3d_pallas.1} parent=75 // pred_fallthru
        _
    $region76: #{bottleneck3d_pallas.1} parent=5 // pred_fallthru
      _
  $region6: #{bottleneck3d_pallas.1} parent=0 // loop_footer
    %s22 = sadd.s32 1, %s18
  $region7: #{bottleneck3d_pallas.1} parent=0 // loop_footer_branch
    %17 = sbr.rel target = $region3
  $region8: #{bottleneck3d_pallas.1} parent=0 // loop_exit
    _

</llo_original>
